<compile_context>
chip_gen: v7x
topology: tpu7x:2x2x1
jax: 0.10.0
libtpu: 0.0.40
codegen_flags: <defaults>
</compile_context>

<pallas_src>
import jax
import jax.numpy as jnp
from jax.experimental import pallas as pl
from jax.experimental.pallas import tpu as pltpu

BN_EPS = 1e-5
HIDDEN = 256
LANE = 128


def _round_up(n, m):
    return (n + m - 1) // m * m


def _bn_train_fused(h, gamma, beta):
    """Training-mode BatchNorm1d in one pass over h.

    mean/var from sum & sum-of-squares (biased variance, eps=1e-5), then the
    normalization is folded into a single scale/shift FMA per element.
    All math in f32 (safe on v5e, which lacks bf16 VPU/EUP paths).
    """
    inv_n = 1.0 / h.shape[0]
    mean = jnp.sum(h, axis=0, keepdims=True) * inv_n
    ex2 = jnp.sum(h * h, axis=0, keepdims=True) * inv_n
    var = jnp.maximum(ex2 - mean * mean, 0.0)          # guard tiny negative from cancellation
    scale = gamma * jax.lax.rsqrt(var + BN_EPS)        # rsqrt -> EUP slot (free vs VALU)
    shift = beta - mean * scale
    return h * scale + shift                           # one mul + one add per element


def refinement_mlp_kernel(x_ref, w1_ref, w2_ref, w3_ref, vec_ref, out_ref):
    """fc1 -> bn1 -> relu -> fc2 -> bn2 -> relu -> fc3 (+b3), entirely in VMEM.

    x_ref   : (B, D)   f32   flattened landmark coordinates
    w1_ref  : (D, H)   bf16
    w2_ref  : (H, H)   bf16
    w3_ref  : (H, Dp)  bf16  (output dim zero-padded to a multiple of 128 lanes)
    vec_ref : (8, H)   f32   rows: [g1, beta1, g2, beta2, b3(padded), 0, 0, 0]
    out_ref : (B, Dp)  f32   lane-dense padded output (wrapper slices back to D)

    b1/b2 are intentionally absent: a per-feature bias immediately followed by a
    training-mode BatchNorm is removed exactly by the mean subtraction.
    """
    dp = out_ref.shape[1]
    x = x_ref[...]

    # fc1 -> bn1 -> relu   (bf16 MXU operands, f32 accumulation, f32 BN math)
    h1 = jnp.dot(x.astype(jnp.bfloat16), w1_ref[...],
                 preferred_element_type=jnp.float32)
    h1 = jnp.maximum(_bn_train_fused(h1, vec_ref[0:1, :], vec_ref[1:2, :]), 0.0)

    # fc2 -> bn2 -> relu
    h2 = jnp.dot(h1.astype(jnp.bfloat16), w2_ref[...],
                 preferred_element_type=jnp.float32)
    h2 = jnp.maximum(_bn_train_fused(h2, vec_ref[2:3, :], vec_ref[3:4, :]), 0.0)

    # fc3 + b3 -> lane-dense store
    out = jnp.dot(h2.astype(jnp.bfloat16), w3_ref[...],
                  preferred_element_type=jnp.float32)
    out = out + vec_ref[4:5, :dp]
    out_ref[...] = out.astype(out_ref.dtype)


@jax.jit
def refinement_mlp(x, packed):
    """x: (B, num_landmarks*2) f32 -> coordinate deltas (B, num_landmarks*2) f32."""
    B, D = x.shape
    H = packed["w2"].shape[0]
    Dp = packed["w3"].shape[1]

    flops = 2 * B * (D * H + H * H + H * Dp) + 12 * B * H       # matmuls + BN/ReLU elementwise
    bytes_accessed = (x.size * 4 + packed["w1"].size * 2 + packed["w2"].size * 2
                      + packed["w3"].size * 2 + packed["vecs"].size * 4 + B * Dp * 4)

    vmem = pl.BlockSpec(memory_space=pltpu.MemorySpace.VMEM)
    out_padded = pl.pallas_call(
        refinement_mlp_kernel,
        out_shape=jax.ShapeDtypeStruct((B, Dp), jnp.float32),
        in_specs=[vmem] * 5,
        out_specs=vmem,
        cost_estimate=pl.CostEstimate(flops=flops, transcendentals=2 * H,
                                      bytes_accessed=bytes_accessed),
    )(x, packed["w1"], packed["w2"], packed["w3"], packed["vecs"])
    return out_padded[:, :D]


def init_params(key, num_landmarks, hidden_dim=HIDDEN):
    """Raw f32 parameters matching the PyTorch RefinementMLP (weights pre-transposed to (in, out))."""
    input_dim = num_landmarks * 2
    ks = jax.random.split(key, 8)

    def lin(k, fan_in, fan_out):
        kw, kb = jax.random.split(k)
        bound = 1.0 / jnp.sqrt(fan_in)
        w = jax.random.uniform(kw, (fan_in, fan_out), jnp.float32, -bound, bound)
        b = jax.random.uniform(kb, (1, fan_out), jnp.float32, -bound, bound)
        return w, b

    w1, b1 = lin(ks[0], input_dim, hidden_dim)
    w2, b2 = lin(ks[1], hidden_dim, hidden_dim)
    w3, b3 = lin(ks[2], hidden_dim, input_dim)

    g1 = 1.0 + 0.1 * jax.random.normal(ks[3], (1, hidden_dim), jnp.float32)
    beta1 = 0.05 * jax.random.normal(ks[4], (1, hidden_dim), jnp.float32)
    g2 = 1.0 + 0.1 * jax.random.normal(ks[5], (1, hidden_dim), jnp.float32)
    beta2 = 0.05 * jax.random.normal(ks[6], (1, hidden_dim), jnp.float32)

    return dict(w1=w1, b1=b1, g1=g1, beta1=beta1,
                w2=w2, b2=b2, g2=g2, beta2=beta2,
                w3=w3, b3=b3)


def pack_params(raw):
    """Kernel-side parameter layout: bf16 weights + one packed f32 vector block.

    b1/b2 are dropped (cancelled by training-mode BN); b3 lives in row 4 of the
    (8, H) block; W3's output dim is zero-padded to a multiple of 128 lanes.
    """
    H = raw["w2"].shape[0]
    D = raw["w3"].shape[1]
    Dp = _round_up(D, LANE)
    assert Dp <= H, "output padding assumes num_landmarks*2 <= hidden_dim"

    w3_pad = jnp.zeros((H, Dp), jnp.float32).at[:, :D].set(raw["w3"])
    vecs = jnp.zeros((8, H), jnp.float32)
    vecs = vecs.at[0, :].set(raw["g1"][0])
    vecs = vecs.at[1, :].set(raw["beta1"][0])
    vecs = vecs.at[2, :].set(raw["g2"][0])
    vecs = vecs.at[3, :].set(raw["beta2"][0])
    vecs = vecs.at[4, :D].set(raw["b3"][0])

    return dict(w1=raw["w1"].astype(jnp.bfloat16),
                w2=raw["w2"].astype(jnp.bfloat16),
                w3=w3_pad.astype(jnp.bfloat16),
                vecs=vecs)


def refinement_mlp_ref_mirror(x, packed, d_out):
    """Pure-JAX mirror of the kernel math (bf16 matmul operands, fused f32 BN)."""
    v = packed["vecs"]
    h1 = jnp.dot(x.astype(jnp.bfloat16), packed["w1"], preferred_element_type=jnp.float32)
    h1 = jnp.maximum(_bn_train_fused(h1, v[0:1], v[1:2]), 0.0)
    h2 = jnp.dot(h1.astype(jnp.bfloat16), packed["w2"], preferred_element_type=jnp.float32)
    h2 = jnp.maximum(_bn_train_fused(h2, v[2:3], v[3:4]), 0.0)
    out = jnp.dot(h2.astype(jnp.bfloat16), packed["w3"], preferred_element_type=jnp.float32)
    out = out + v[4:5, :packed["w3"].shape[1]]
    return out[:, :d_out]


def refinement_mlp_ref_f32(x, raw):
    """Full-precision reference with the PyTorch module's exact (bias-included) math."""
    def bn(h, g, b):
        mean = jnp.mean(h, axis=0, keepdims=True)
        var = jnp.mean((h - mean) ** 2, axis=0, keepdims=True)
        return (h - mean) * jax.lax.rsqrt(var + BN_EPS) * g + b

    h1 = jnp.maximum(bn(x @ raw["w1"] + raw["b1"], raw["g1"], raw["beta1"]), 0.0)
    h2 = jnp.maximum(bn(h1 @ raw["w2"] + raw["b2"], raw["g2"], raw["beta2"]), 0.0)
    return h2 @ raw["w3"] + raw["b3"]


if __name__ == "__main__":
    key = jax.random.PRNGKey(0)
    num_landmarks = 19     # module default -> input_dim = 38
    batch = 8              # multiple of the f32 sublane (8); training-mode BN needs B > 1

    k_x, k_p = jax.random.split(key)
    # Landmark coordinates in (64, 64) heatmap space, flattened to (B, num_landmarks*2).
    x = jax.random.uniform(k_x, (batch, num_landmarks * 2), jnp.float32, 0.0, 64.0)
    raw = init_params(k_p, num_landmarks)
    packed = pack_params(raw)

    deltas = jax.block_until_ready(refinement_mlp(x, packed))
    assert deltas.shape == (batch, num_landmarks * 2)

    # 1) Tight check against a pure-JAX mirror of the kernel math.
    ref_m = refinement_mlp_ref_mirror(x, packed, num_landmarks * 2)
    assert jnp.allclose(deltas, ref_m, atol=1e-2, rtol=1e-2), "mismatch vs mirrored reference"

    # 2) Loose check against the full-precision, bias-included PyTorch-faithful math:
    #    confirms dropping b1/b2 and bf16 matmul operands preserve forward semantics.
    ref_f = refinement_mlp_ref_f32(x, raw)
    assert jnp.allclose(deltas, ref_f, atol=2e-1, rtol=1e-1), "mismatch vs f32 reference"

    print("KERNEL_OK")
</pallas_src>

<mosaic_0001>
module attributes {stable_mosaic.version = 11 : i64} {
  func.func @refinement_mlp_kernel(%arg0: memref<8x38xf32, #tpu.memory_space<vmem>>, %arg1: memref<38x256xbf16, #tpu.memory_space<vmem>>, %arg2: memref<256x256xbf16, #tpu.memory_space<vmem>>, %arg3: memref<256x128xbf16, #tpu.memory_space<vmem>>, %arg4: memref<8x256xf32, #tpu.memory_space<vmem>>, %arg5: memref<8x128xf32, #tpu.memory_space<vmem>>) attributes {dimension_semantics = [], scalar_prefetch = 0 : i64, scratch_operands = 0 : i64, tpu.core_type = #tpu.core_type<tc>} {
    %c0 = arith.constant 0 : index
    %c0_0 = arith.constant 0 : index
    %0 = vector.load %arg0[%c0, %c0_0] : memref<8x38xf32, #tpu.memory_space<vmem>>, vector<8x38xf32>
    %1 = arith.truncf %0 : vector<8x38xf32> to vector<8x38xbf16>
    %c0_1 = arith.constant 0 : index
    %c0_2 = arith.constant 0 : index
    %2 = vector.load %arg1[%c0_1, %c0_2] : memref<38x256xbf16, #tpu.memory_space<vmem>>, vector<38x256xbf16>
    %cst = arith.constant dense<0.000000e+00> : vector<8x256xf32>
    %3 = tpu.matmul %1, %2, %cst {dimension_numbers = #tpu.dot_dimension_numbers<[1], [0], [0], [1], [0, 0, 1, 1], [], []>} : vector<8x38xbf16>, vector<38x256xbf16>, vector<8x256xf32> -> vector<8x256xf32>
    %c0_3 = arith.constant 0 : index
    %c0_4 = arith.constant 0 : index
    %4 = vector.load %arg4[%c0_3, %c0_4] : memref<8x256xf32, #tpu.memory_space<vmem>>, vector<1x256xf32>
    %c1 = arith.constant 1 : index
    %c0_5 = arith.constant 0 : index
    %5 = vector.load %arg4[%c1, %c0_5] : memref<8x256xf32, #tpu.memory_space<vmem>>, vector<1x256xf32>
    %cst_6 = arith.constant dense<0.000000e+00> : vector<256xf32>
    %6 = vector.multi_reduction <add>, %3, %cst_6 [0] : vector<8x256xf32> to vector<256xf32>
    %7 = vector.shape_cast %6 : vector<256xf32> to vector<1x256xf32>
    %cst_7 = arith.constant 1.250000e-01 : f32
    %8 = vector.broadcast %cst_7 : f32 to vector<1x256xf32>
    %9 = arith.mulf %7, %8 : vector<1x256xf32>
    %10 = arith.mulf %3, %3 : vector<8x256xf32>
    %cst_8 = arith.constant dense<0.000000e+00> : vector<256xf32>
    %11 = vector.multi_reduction <add>, %10, %cst_8 [0] : vector<8x256xf32> to vector<256xf32>
    %12 = vector.shape_cast %11 : vector<256xf32> to vector<1x256xf32>
    %cst_9 = arith.constant 1.250000e-01 : f32
    %13 = vector.broadcast %cst_9 : f32 to vector<1x256xf32>
    %14 = arith.mulf %12, %13 : vector<1x256xf32>
    %15 = arith.mulf %9, %9 : vector<1x256xf32>
    %16 = arith.subf %14, %15 : vector<1x256xf32>
    %cst_10 = arith.constant 0.000000e+00 : f32
    %17 = vector.broadcast %cst_10 : f32 to vector<1x256xf32>
    %18 = arith.maximumf %16, %17 : vector<1x256xf32>
    %cst_11 = arith.constant 9.99999974E-6 : f32
    %19 = vector.broadcast %cst_11 : f32 to vector<1x256xf32>
    %20 = arith.addf %18, %19 : vector<1x256xf32>
    %21 = math.rsqrt %20 : vector<1x256xf32>
    %22 = arith.mulf %4, %21 : vector<1x256xf32>
    %23 = arith.mulf %9, %22 : vector<1x256xf32>
    %24 = arith.subf %5, %23 : vector<1x256xf32>
    %25 = vector.broadcast %22 : vector<1x256xf32> to vector<8x256xf32>
    %26 = arith.mulf %3, %25 : vector<8x256xf32>
    %27 = vector.broadcast %24 : vector<1x256xf32> to vector<8x256xf32>
    %28 = arith.addf %26, %27 : vector<8x256xf32>
    %cst_12 = arith.constant 0.000000e+00 : f32
    %29 = vector.broadcast %cst_12 : f32 to vector<8x256xf32>
    %30 = arith.maximumf %28, %29 : vector<8x256xf32>
    %31 = arith.truncf %30 : vector<8x256xf32> to vector<8x256xbf16>
    %c0_13 = arith.constant 0 : index
    %c0_14 = arith.constant 0 : index
    %32 = vector.load %arg2[%c0_13, %c0_14] : memref<256x256xbf16, #tpu.memory_space<vmem>>, vector<256x256xbf16>
    %cst_15 = arith.constant dense<0.000000e+00> : vector<8x256xf32>
    %33 = tpu.matmul %31, %32, %cst_15 {dimension_numbers = #tpu.dot_dimension_numbers<[1], [0], [0], [1], [0, 0, 1, 1], [], []>} : vector<8x256xbf16>, vector<256x256xbf16>, vector<8x256xf32> -> vector<8x256xf32>
    %c2 = arith.constant 2 : index
    %c0_16 = arith.constant 0 : index
    %34 = vector.load %arg4[%c2, %c0_16] : memref<8x256xf32, #tpu.memory_space<vmem>>, vector<1x256xf32>
    %c3 = arith.constant 3 : index
    %c0_17 = arith.constant 0 : index
    %35 = vector.load %arg4[%c3, %c0_17] : memref<8x256xf32, #tpu.memory_space<vmem>>, vector<1x256xf32>
    %cst_18 = arith.constant dense<0.000000e+00> : vector<256xf32>
    %36 = vector.multi_reduction <add>, %33, %cst_18 [0] : vector<8x256xf32> to vector<256xf32>
    %37 = vector.shape_cast %36 : vector<256xf32> to vector<1x256xf32>
    %cst_19 = arith.constant 1.250000e-01 : f32
    %38 = vector.broadcast %cst_19 : f32 to vector<1x256xf32>
    %39 = arith.mulf %37, %38 : vector<1x256xf32>
    %40 = arith.mulf %33, %33 : vector<8x256xf32>
    %cst_20 = arith.constant dense<0.000000e+00> : vector<256xf32>
    %41 = vector.multi_reduction <add>, %40, %cst_20 [0] : vector<8x256xf32> to vector<256xf32>
    %42 = vector.shape_cast %41 : vector<256xf32> to vector<1x256xf32>
    %cst_21 = arith.constant 1.250000e-01 : f32
    %43 = vector.broadcast %cst_21 : f32 to vector<1x256xf32>
    %44 = arith.mulf %42, %43 : vector<1x256xf32>
    %45 = arith.mulf %39, %39 : vector<1x256xf32>
    %46 = arith.subf %44, %45 : vector<1x256xf32>
    %cst_22 = arith.constant 0.000000e+00 : f32
    %47 = vector.broadcast %cst_22 : f32 to vector<1x256xf32>
    %48 = arith.maximumf %46, %47 : vector<1x256xf32>
    %cst_23 = arith.constant 9.99999974E-6 : f32
    %49 = vector.broadcast %cst_23 : f32 to vector<1x256xf32>
    %50 = arith.addf %48, %49 : vector<1x256xf32>
    %51 = math.rsqrt %50 : vector<1x256xf32>
    %52 = arith.mulf %34, %51 : vector<1x256xf32>
    %53 = arith.mulf %39, %52 : vector<1x256xf32>
    %54 = arith.subf %35, %53 : vector<1x256xf32>
    %55 = vector.broadcast %52 : vector<1x256xf32> to vector<8x256xf32>
    %56 = arith.mulf %33, %55 : vector<8x256xf32>
    %57 = vector.broadcast %54 : vector<1x256xf32> to vector<8x256xf32>
    %58 = arith.addf %56, %57 : vector<8x256xf32>
    %cst_24 = arith.constant 0.000000e+00 : f32
    %59 = vector.broadcast %cst_24 : f32 to vector<8x256xf32>
    %60 = arith.maximumf %58, %59 : vector<8x256xf32>
    %61 = arith.truncf %60 : vector<8x256xf32> to vector<8x256xbf16>
    %c0_25 = arith.constant 0 : index
    %c0_26 = arith.constant 0 : index
    %62 = vector.load %arg3[%c0_25, %c0_26] : memref<256x128xbf16, #tpu.memory_space<vmem>>, vector<256x128xbf16>
    %cst_27 = arith.constant dense<0.000000e+00> : vector<8x128xf32>
    %63 = tpu.matmul %61, %62, %cst_27 {dimension_numbers = #tpu.dot_dimension_numbers<[1], [0], [0], [1], [0, 0, 1, 1], [], []>} : vector<8x256xbf16>, vector<256x128xbf16>, vector<8x128xf32> -> vector<8x128xf32>
    %c4 = arith.constant 4 : index
    %c0_28 = arith.constant 0 : index
    %64 = vector.load %arg4[%c4, %c0_28] : memref<8x256xf32, #tpu.memory_space<vmem>>, vector<1x128xf32>
    %65 = vector.broadcast %64 : vector<1x128xf32> to vector<8x128xf32>
    %66 = arith.addf %63, %65 : vector<8x128xf32>
    %c0_29 = arith.constant 0 : index
    %c0_30 = arith.constant 0 : index
    %67 = vector.load %arg5[%c0_29, %c0_30] : memref<8x128xf32, #tpu.memory_space<vmem>>, vector<8x128xf32>
    tpu.vector_store %arg5[%c0_29, %c0_30], %66 {strides = array<i32>} : memref<8x128xf32, #tpu.memory_space<vmem>>, vector<8x128xf32>,
    return
  }
}

</mosaic_0001>

<llo_original>
// kernel: refinement_mlp.1
$region0: #{refinement_mlp.1}
  #allocation0 [shape = 'u32[]', space=smem, size = 0x4, offset = 0x4, fixed_abs, tag = 'smem constant byte address 0x4 - core index']
  #allocation1 [shape = 'u32[144,128]{1,0:T(1,128)}', space=vmem, size = 0x12000, scoped, tag = 'internal scratch']
  %s0 = inlined_call_operand.hbm [shape: f32[8,38], index: 0, kind: input, shape index: {}]
  %s1 = inlined_call_operand.hbm [shape: bf16[38,256], index: 1, kind: input, shape index: {}]
  %s2 = inlined_call_operand.hbm [shape: bf16[256,256], index: 2, kind: input, shape index: {}]
  %s3 = inlined_call_operand.hbm [shape: bf16[256,128], index: 3, kind: input, shape index: {}]
  %s4 = inlined_call_operand.hbm [shape: f32[8,256], index: 4, kind: input, shape index: {}]
  %s5 = inlined_call_operand.hbm [shape: f32[8,128], index: 5, kind: output, shape index: {}]
  %s6 = sld [smem:[#allocation0]]
  $region50: #{refinement_mlp.1} parent=0
    _
  %s8 = ssub.s32 1, %s6
  %s9 = scalar_select 0, %s8, %s6
  $region1: #{refinement_mlp.1} parent=0
    #allocation2 [shape = 'u8[4096]{0}', space=vmem, size = 0x1000, scoped, tag = 'input window, operand 0, single buffered']
    #allocation3 [shape = 's32[1]{0}', space=sflag, size = 0x4, scoped, tag = 'scoped memory for refinement_mlp.1']
    #allocation4 [shape = 's32[1]{0}', space=sflag, size = 0x4, scoped, tag = 'scoped memory for refinement_mlp.1']
    #allocation5 [shape = 'u8[20480]{0}', space=vmem, size = 0x5000, scoped, tag = 'input window, operand 1, single buffered']
    #allocation6 [shape = 's32[1]{0}', space=sflag, size = 0x4, scoped, tag = 'scoped memory for refinement_mlp.1']
    #allocation7 [shape = 'u8[131072]{0}', space=vmem, size = 0x20000, scoped, tag = 'input window, operand 2, single buffered']
    #allocation8 [shape = 'u8[65536]{0}', space=vmem, size = 0x10000, scoped, tag = 'input window, operand 3, single buffered']
    #allocation9 [shape = 's32[1]{0}', space=sflag, size = 0x4, scoped, tag = 'scoped memory for refinement_mlp.1']
    #allocation10 [shape = 'u8[8192]{0}', space=vmem, size = 0x2000, scoped, tag = 'input window, operand 4, single buffered']
    #allocation11 [shape = 'u8[4096]{0}', space=vmem, size = 0x1000, scoped, tag = 'output window, operand 0, single buffered']
    %10 = vsyncpa [#allocation3], 0
    %11 = vsyncpa [#allocation6], 0
    %12 = vsyncpa [#allocation9], 0
    %13 = vsyncpa [#allocation4], 0
    // Predicated region
    $region2: #{refinement_mlp.1} parent=1 // pred_check
      _
    $region3: #{refinement_mlp.1} parent=1 // pred_check_branch
      %15 = sbr.rel (0) target = $region5
    $region4: #{refinement_mlp.1} parent=1 // pred_region
      %s17 = ssub.s32 128, 128
      %18 = vsyncadd [#allocation3], %s17
      %s20 = sshll.u32 [#allocation2], 4
      %s21 = int_to_ptr.vmem [resolvable:$true] %s20
      %23 = dma.hbm_to_vmem [thread:$0]  %s0, 128, %s21, [#allocation3]
    $region5: #{refinement_mlp.1} parent=1 // pred_fallthru
      _
    // Predicated region
    $region6: #{refinement_mlp.1} parent=1 // pred_check
      _
    $region7: #{refinement_mlp.1} parent=1 // pred_check_branch
      %25 = sbr.rel (0) target = $region9
    $region8: #{refinement_mlp.1} parent=1 // pred_region
      %s27 = ssub.s32 640, 640
      %28 = vsyncadd [#allocation6], %s27
      %s29 = sshll.u32 [#allocation5], 4
      %s30 = int_to_ptr.vmem [resolvable:$true] %s29
      %35 = dma.hbm_to_vmem [thread:$0]  %s1, 640, %s30, [#allocation6], 128, 128, 8
    $region9: #{refinement_mlp.1} parent=1 // pred_fallthru
      _
    // Predicated region
    $region10: #{refinement_mlp.1} parent=1 // pred_check
      _
    $region11: #{refinement_mlp.1} parent=1 // pred_check_branch
      %37 = sbr.rel (0) target = $region13
    $region12: #{refinement_mlp.1} parent=1 // pred_region
      %s39 = ssub.s32 4096, 4096
      %40 = vsyncadd [#allocation6], %s39
      %s41 = sshll.u32 [#allocation7], 4
      %s42 = int_to_ptr.vmem [resolvable:$true] %s41
      %47 = dma.hbm_to_vmem [thread:$0]  %s2, 4096, %s42, [#allocation6], 128, 128, 8
    $region13: #{refinement_mlp.1} parent=1 // pred_fallthru
      _
    // Predicated region
    $region14: #{refinement_mlp.1} parent=1 // pred_check
      _
    $region15: #{refinement_mlp.1} parent=1 // pred_check_branch
      %49 = sbr.rel (0) target = $region17
    $region16: #{refinement_mlp.1} parent=1 // pred_region
      %s51 = ssub.s32 2048, 2048
      %52 = vsyncadd [#allocation9], %s51
      %s53 = sshll.u32 [#allocation8], 4
      %s54 = int_to_ptr.vmem [resolvable:$true] %s53
      %59 = dma.hbm_to_vmem [thread:$0]  %s3, 2048, %s54, [#allocation9], 64, 64, 4
    $region17: #{refinement_mlp.1} parent=1 // pred_fallthru
      _
    // Predicated region
    $region18: #{refinement_mlp.1} parent=1 // pred_check
      _
    $region19: #{refinement_mlp.1} parent=1 // pred_check_branch
      %61 = sbr.rel (0) target = $region21
    $region20: #{refinement_mlp.1} parent=1 // pred_region
      %s63 = ssub.s32 256, 256
      %64 = vsyncadd [#allocation9], %s63
      %s66 = sshll.u32 [#allocation10], 4
      %s67 = int_to_ptr.vmem [resolvable:$true] %s66
      %69 = dma.hbm_to_vmem [thread:$0]  %s4, 256, %s67, [#allocation9]
    $region21: #{refinement_mlp.1} parent=1 // pred_fallthru
      _
    // Predicated region
    $region22: #{refinement_mlp.1} parent=1 // pred_check
      _
    $region23: #{refinement_mlp.1} parent=1 // pred_check_branch
      %71 = sbr.rel (0) target = $region25
    $region24: #{refinement_mlp.1} parent=1 // pred_region
      %72 = dma.done [#allocation3], 128
    $region25: #{refinement_mlp.1} parent=1 // pred_fallthru
      _
    // Predicated region
    $region26: #{refinement_mlp.1} parent=1 // pred_check
      _
    $region27: #{refinement_mlp.1} parent=1 // pred_check_branch
      %74 = sbr.rel (0) target = $region29
    $region28: #{refinement_mlp.1} parent=1 // pred_region
      %75 = dma.done [#allocation6], 640
    $region29: #{refinement_mlp.1} parent=1 // pred_fallthru
      _
    // Predicated region
    $region30: #{refinement_mlp.1} parent=1 // pred_check
      _
    $region31: #{refinement_mlp.1} parent=1 // pred_check_branch
      %77 = sbr.rel (0) target = $region33
    $region32: #{refinement_mlp.1} parent=1 // pred_region
      %78 = dma.done [#allocation6], 4096
    $region33: #{refinement_mlp.1} parent=1 // pred_fallthru
      _
    // Predicated region
    $region34: #{refinement_mlp.1} parent=1 // pred_check
      _
    $region35: #{refinement_mlp.1} parent=1 // pred_check_branch
      %80 = sbr.rel (0) target = $region37
    $region36: #{refinement_mlp.1} parent=1 // pred_region
      %81 = dma.done [#allocation9], 2048
    $region37: #{refinement_mlp.1} parent=1 // pred_fallthru
      _
    // Predicated region
    $region38: #{refinement_mlp.1} parent=1 // pred_check
      _
    $region39: #{refinement_mlp.1} parent=1 // pred_check_branch
      %83 = sbr.rel (0) target = $region41
    $region40: #{refinement_mlp.1} parent=1 // pred_region
      %84 = dma.done [#allocation9], 256
    $region41: #{refinement_mlp.1} parent=1 // pred_fallthru
      _
    %v86 = vld [vmem:[#allocation2] sm:$0xff]
    %v87 = vpack.c.bf16 %v86, %v86
    %v88 = vld [vmem:[#allocation5] sm:$0xff]
    %v89 = vld [vmem:[#allocation5 + $0x8] sm:$0xff]
    %v90 = vld [vmem:[#allocation5 + $0x10] sm:$0xff]
    %v91 = vld [vmem:[#allocation5 + $0x18] sm:$0xff]
    %v92 = vld [vmem:[#allocation5 + $0x20] sm:$0x77]
    %v98 = vunpack.c.l.b16 %v88
    %v99 = vunpack.c.h.b16 %v88
    %v100 = vunpack.c.l.b16 %v89
    %v101 = vunpack.c.h.b16 %v89
    %v102 = vunpack.c.l.b16 %v90
    %v103 = vunpack.c.h.b16 %v90
    %v104 = vunpack.c.l.b16 %v91
    %v105 = vunpack.c.h.b16 %v91
    %v106 = vunpack.c.l.b16 %v92
    %v107 = vunpack.c.h.b16 %v92
    %v108 = vpack.c.b16 %v100, %v98
    %v109 = vpack.c.b16 %v101, %v99
    %v110 = vpack.c.b16 %v104, %v102
    %v111 = vpack.c.b16 %v105, %v103
    %v112 = vpack.c.b16 %v106, %v106
    %v113 = vpack.c.b16 %v107, %v107
    %vm118 = vcmask 310272
    %v120 = vsel %vm118, %v87, 0
    %vm122 = vcmask 1042432
    %v124 = vsel %vm122, %v112, 0
    %v127 = vsel %vm122, %v113, 0
    %129 = vmatprep.subr.bf16.mxu0 %v109
    %130 = vmatpush1.bf16.msra.mxu0 %v108
    %131 = vmatprep.subr.bf16.mxu0 %v111
    %132 = vmatpush1.bf16.msra.mxu0 %v110
    %133 = vmatprep.subr.bf16.mxu0 %v127
    %134 = vmatpush1.bf16.msra.mxu0 %v124
    %135 = vmatprep.subr.bf16.mxu0 0
    %136 = vmatpush1.bf16.msra.mxu0 0
    %137 = vmatprep.subr.bf16.mxu0 0
    %138 = vmatpush1.bf16.msra.mxu0 0
    %139 = vmatprep.subr.bf16.mxu0 0
    %140 = vmatpush1.bf16.msra.mxu0 0
    %141 = vmatprep.subr.bf16.mxu0 0
    %142 = vmatpush1.bf16.msra.mxu0 0
    %143 = vmatprep.subr.bf16.mxu0 0
    %144 = vmatpush1.bf16.msra.mxu0 0
    %145 = vmatprep.subr.bf16.mxu0 0
    %146 = vmatpush1.bf16.msra.mxu0 0
    %147 = vmatprep.subr.bf16.mxu0 0
    %148 = vmatpush1.bf16.msra.mxu0 0
    %149 = vmatprep.subr.bf16.mxu0 0
    %150 = vmatpush1.bf16.msra.mxu0 0
    %151 = vmatprep.subr.bf16.mxu0 0
    %152 = vmatpush1.bf16.msra.mxu0 0
    %153 = vmatprep.subr.bf16.mxu0 0
    %154 = vmatpush1.bf16.msra.mxu0 0
    %155 = vmatprep.subr.bf16.mxu0 0
    %156 = vmatpush1.bf16.msra.mxu0 0
    %157 = vmatprep.subr.bf16.mxu0 0
    %158 = vmatpush1.bf16.msra.mxu0 0
    %159 = vmatprep.subr.bf16.mxu0 0
    %160 = vmatpush1.bf16.msra.mxu0 0
    %161 = vmatprep.mubr.bf16.mxu0 0
    %162 = vmatmul.mubr.bf16.gmra.mrb[0].mxu0 %v120
    %v163 = vpop.f32.mrb[0].mxu0
    %v164 = vadd.f32 0.0, %v163
    %v165 = vpop.f32.mrb[0].mxu0
    %v166 = vadd.f32 0.0, %v165
    %v167 = vpop.f32.mrb[0].mxu0
    %v168 = vpop.f32.mrb[0].mxu0
    %169 = vdwg.mxu0
    %v170 = vld [vmem:[#allocation10] ss:$8 sm:$0x3]
    %s171 = scalar_lea.vmem [#allocation10], 1
    %v172 = vld [vmem:[%s171] ss:$8 sm:$0x3]
    %v173 = vrot.slane %v164, 4
    %v174 = vadd.f32 %v164, %v173
    %v175 = vrot.slane %v174, 2
    %v176 = vadd.f32 %v174, %v175
    %v177 = vrot.slane %v176, 1
    %v178 = vadd.f32 %v176, %v177
    %v179 = vrot.slane %v166, 4
    %v180 = vadd.f32 %v166, %v179
    %v181 = vrot.slane %v180, 2
    %v182 = vadd.f32 %v180, %v181
    %v183 = vrot.slane %v182, 1
    %v184 = vadd.f32 %v182, %v183
    %v185 = vmul.f32 %v178, 0.125
    %v186 = vmul.f32 %v184, 0.125
    %v187 = vmul.f32 %v164, %v164
    %v188 = vmul.f32 %v166, %v166
    %v189 = vrot.slane %v187, 4
    %v190 = vadd.f32 %v187, %v189
    %v191 = vrot.slane %v190, 2
    %v192 = vadd.f32 %v190, %v191
    %v193 = vrot.slane %v192, 1
    %v194 = vadd.f32 %v192, %v193
    %v195 = vrot.slane %v188, 4
    %v196 = vadd.f32 %v188, %v195
    %v197 = vrot.slane %v196, 2
    %v198 = vadd.f32 %v196, %v197
    %v199 = vrot.slane %v198, 1
    %v200 = vadd.f32 %v198, %v199
    %v201 = vmul.f32 %v194, 0.125
    %v202 = vmul.f32 %v200, 0.125
    %v203 = vmul.f32 %v185, %v185
    %v204 = vmul.f32 %v186, %v186
    %v205 = vsub.f32 %v201, %v203
    %v206 = vsub.f32 %v202, %v204
    %v207 = vmax.f32 %v205, 0.0
    %v208 = vmax.f32 %v206, 0.0
    %v209 = vadd.f32 %v207, 1e-05
    %v210 = vadd.f32 %v208, 1e-05
    %v211 = vrsqrt.pop %v209
    %v212 = vrsqrt.pop %v210
    %v215 = vcombine.low %v211, %v212
    %v217 = vunpack.c.l.s4 1966171168
    %v218 = vunpack.c.0.s8 %v217
    %v219 = vlaneseq
    %v220 = vshrl.u32 %v219, 7
    %v221 = vsub.s32 %v218, %v220
    %v222 = vrot.slane %v215, %v221
    %v224 = vunpack.c.l.s4 1966171168
    %v225 = vunpack.c.0.s8 %v224
    %v226 = vlaneseq
    %v227 = vshrl.u32 %v226, 7
    %v228 = vsub.s32 %v225, %v227
    %v229 = vrot.slane %v222, %v228
    %v231 = vmul.f32 %v170, %v229
    %v233 = vlaneseq
    %v234 = vshrl.u32 %v233, 7
    %v235 = vsub.s32 0, %v234
    %v236 = vrot.slane %v231, %v235
    %v237 = vlaneseq
    %v238 = vshrl.u32 %v237, 7
    %v239 = vsub.s32 1, %v238
    %v240 = vrot.slane %v231, %v239
    %v243 = vmul.f32 %v185, %v236
    %v244 = vmul.f32 %v186, %v240
    %v247 = vcombine.low %v243, %v244
    %v249 = vunpack.c.l.s4 1966171168
    %v250 = vunpack.c.0.s8 %v249
    %v251 = vlaneseq
    %v252 = vshrl.u32 %v251, 7
    %v253 = vsub.s32 %v250, %v252
    %v254 = vrot.slane %v247, %v253
    %v256 = vunpack.c.l.s4 1966171168
    %v257 = vunpack.c.0.s8 %v256
    %v258 = vlaneseq
    %v259 = vshrl.u32 %v258, 7
    %v260 = vsub.s32 %v257, %v259
    %v261 = vrot.slane %v254, %v260
    %v263 = vsub.f32 %v172, %v261
    %v264 = vmul.f32 %v164, %v236
    %v265 = vmul.f32 %v166, %v240
    %v267 = vlaneseq
    %v268 = vshrl.u32 %v267, 7
    %v269 = vsub.s32 0, %v268
    %v270 = vrot.slane %v263, %v269
    %v271 = vlaneseq
    %v272 = vshrl.u32 %v271, 7
    %v273 = vsub.s32 1, %v272
    %v274 = vrot.slane %v263, %v273
    %v277 = vadd.f32 %v264, %v270
    %v278 = vadd.f32 %v265, %v274
    %v279 = vmax.f32 %v277, 0.0
    %v280 = vmax.f32 %v278, 0.0
    %v281 = vpack.c.bf16 %v279, %v279
    %v282 = vpack.c.bf16 %v280, %v280
    %v283 = vld [vmem:[#allocation7] sm:$0xff]
    %v284 = vld [vmem:[#allocation7 + $0x8] sm:$0xff]
    %v285 = vld [vmem:[#allocation7 + $0x10] sm:$0xff]
    %v286 = vld [vmem:[#allocation7 + $0x18] sm:$0xff]
    %v287 = vld [vmem:[#allocation7 + $0x20] sm:$0xff]
    %v288 = vld [vmem:[#allocation7 + $0x28] sm:$0xff]
    %v289 = vld [vmem:[#allocation7 + $0x30] sm:$0xff]
    %v290 = vld [vmem:[#allocation7 + $0x38] sm:$0xff]
    %v291 = vld [vmem:[#allocation7 + $0x40] sm:$0xff]
    %v292 = vld [vmem:[#allocation7 + $0x48] sm:$0xff]
    %v293 = vld [vmem:[#allocation7 + $0x50] sm:$0xff]
    %v294 = vld [vmem:[#allocation7 + $0x58] sm:$0xff]
    %v295 = vld [vmem:[#allocation7 + $0x60] sm:$0xff]
    %v296 = vld [vmem:[#allocation7 + $0x68] sm:$0xff]
    %v297 = vld [vmem:[#allocation7 + $0x70] sm:$0xff]
    %v298 = vld [vmem:[#allocation7 + $0x78] sm:$0xff]
    %v299 = vld [vmem:[#allocation7 + $0x80] sm:$0xff]
    %v300 = vld [vmem:[#allocation7 + $0x88] sm:$0xff]
    %v301 = vld [vmem:[#allocation7 + $0x90] sm:$0xff]
    %v302 = vld [vmem:[#allocation7 + $0x98] sm:$0xff]
    %v303 = vld [vmem:[#allocation7 + $0xa0] sm:$0xff]
    %v304 = vld [vmem:[#allocation7 + $0xa8] sm:$0xff]
    %v305 = vld [vmem:[#allocation7 + $0xb0] sm:$0xff]
    %v306 = vld [vmem:[#allocation7 + $0xb8] sm:$0xff]
    %v307 = vld [vmem:[#allocation7 + $0xc0] sm:$0xff]
    %v308 = vld [vmem:[#allocation7 + $0xc8] sm:$0xff]
    %v309 = vld [vmem:[#allocation7 + $0xd0] sm:$0xff]
    %v310 = vld [vmem:[#allocation7 + $0xd8] sm:$0xff]
    %v311 = vld [vmem:[#allocation7 + $0xe0] sm:$0xff]
    %v312 = vld [vmem:[#allocation7 + $0xe8] sm:$0xff]
    %v313 = vld [vmem:[#allocation7 + $0xf0] sm:$0xff]
    %v314 = vld [vmem:[#allocation7 + $0xf8] sm:$0xff]
    %v347 = vunpack.c.l.b16 %v283
    %v348 = vunpack.c.h.b16 %v283
    %v349 = vunpack.c.l.b16 %v284
    %v350 = vunpack.c.h.b16 %v284
    %v351 = vunpack.c.l.b16 %v285
    %v352 = vunpack.c.h.b16 %v285
    %v353 = vunpack.c.l.b16 %v286
    %v354 = vunpack.c.h.b16 %v286
    %v355 = vunpack.c.l.b16 %v287
    %v356 = vunpack.c.h.b16 %v287
    %v357 = vunpack.c.l.b16 %v288
    %v358 = vunpack.c.h.b16 %v288
    %v359 = vunpack.c.l.b16 %v289
    %v360 = vunpack.c.h.b16 %v289
    %v361 = vunpack.c.l.b16 %v290
    %v362 = vunpack.c.h.b16 %v290
    %v363 = vunpack.c.l.b16 %v291
    %v364 = vunpack.c.h.b16 %v291
    %v365 = vunpack.c.l.b16 %v292
    %v366 = vunpack.c.h.b16 %v292
    %v367 = vunpack.c.l.b16 %v293
    %v368 = vunpack.c.h.b16 %v293
    %v369 = vunpack.c.l.b16 %v294
    %v370 = vunpack.c.h.b16 %v294
    %v371 = vunpack.c.l.b16 %v295
    %v372 = vunpack.c.h.b16 %v295
    %v373 = vunpack.c.l.b16 %v296
    %v374 = vunpack.c.h.b16 %v296
    %v375 = vunpack.c.l.b16 %v297
    %v376 = vunpack.c.h.b16 %v297
    %v377 = vunpack.c.l.b16 %v298
    %v378 = vunpack.c.h.b16 %v298
    %v379 = vunpack.c.l.b16 %v299
    %v380 = vunpack.c.h.b16 %v299
    %v381 = vunpack.c.l.b16 %v300
    %v382 = vunpack.c.h.b16 %v300
    %v383 = vunpack.c.l.b16 %v301
    %v384 = vunpack.c.h.b16 %v301
    %v385 = vunpack.c.l.b16 %v302
    %v386 = vunpack.c.h.b16 %v302
    %v387 = vunpack.c.l.b16 %v303
    %v388 = vunpack.c.h.b16 %v303
    %v389 = vunpack.c.l.b16 %v304
    %v390 = vunpack.c.h.b16 %v304
    %v391 = vunpack.c.l.b16 %v305
    %v392 = vunpack.c.h.b16 %v305
    %v393 = vunpack.c.l.b16 %v306
    %v394 = vunpack.c.h.b16 %v306
    %v395 = vunpack.c.l.b16 %v307
    %v396 = vunpack.c.h.b16 %v307
    %v397 = vunpack.c.l.b16 %v308
    %v398 = vunpack.c.h.b16 %v308
    %v399 = vunpack.c.l.b16 %v309
    %v400 = vunpack.c.h.b16 %v309
    %v401 = vunpack.c.l.b16 %v310
    %v402 = vunpack.c.h.b16 %v310
    %v403 = vunpack.c.l.b16 %v311
    %v404 = vunpack.c.h.b16 %v311
    %v405 = vunpack.c.l.b16 %v312
    %v406 = vunpack.c.h.b16 %v312
    %v407 = vunpack.c.l.b16 %v313
    %v408 = vunpack.c.h.b16 %v313
    %v409 = vunpack.c.l.b16 %v314
    %v410 = vunpack.c.h.b16 %v314
    %v411 = vpack.c.b16 %v349, %v347
    %v412 = vpack.c.b16 %v350, %v348
    %v413 = vpack.c.b16 %v353, %v351
    %v414 = vpack.c.b16 %v354, %v352
    %v415 = vpack.c.b16 %v357, %v355
    %v416 = vpack.c.b16 %v358, %v356
    %v417 = vpack.c.b16 %v361, %v359
    %v418 = vpack.c.b16 %v362, %v360
    %v419 = vpack.c.b16 %v365, %v363
    %v420 = vpack.c.b16 %v366, %v364
    %v421 = vpack.c.b16 %v369, %v367
    %v422 = vpack.c.b16 %v370, %v368
    %v423 = vpack.c.b16 %v373, %v371
    %v424 = vpack.c.b16 %v374, %v372
    %v425 = vpack.c.b16 %v377, %v375
    %v426 = vpack.c.b16 %v378, %v376
    %v427 = vpack.c.b16 %v381, %v379
    %v428 = vpack.c.b16 %v382, %v380
    %v429 = vpack.c.b16 %v385, %v383
    %v430 = vpack.c.b16 %v386, %v384
    %v431 = vpack.c.b16 %v389, %v387
    %v432 = vpack.c.b16 %v390, %v388
    %v433 = vpack.c.b16 %v393, %v391
    %v434 = vpack.c.b16 %v394, %v392
    %v435 = vpack.c.b16 %v397, %v395
    %v436 = vpack.c.b16 %v398, %v396
    %v437 = vpack.c.b16 %v401, %v399
    %v438 = vpack.c.b16 %v402, %v400
    %v439 = vpack.c.b16 %v405, %v403
    %v440 = vpack.c.b16 %v406, %v404
    %v441 = vpack.c.b16 %v409, %v407
    %v442 = vpack.c.b16 %v410, %v408
    %475 = vmatprep.subr.bf16.mxu0 %v412
    %476 = vmatpush1.bf16.msra.mxu0 %v411
    %477 = vmatprep.subr.bf16.mxu0 %v414
    %478 = vmatpush1.bf16.msra.mxu0 %v413
    %479 = vmatprep.subr.bf16.mxu0 %v416
    %480 = vmatpush1.bf16.msra.mxu0 %v415
    %481 = vmatprep.subr.bf16.mxu0 %v418
    %482 = vmatpush1.bf16.msra.mxu0 %v417
    %483 = vmatprep.subr.bf16.mxu0 %v420
    %484 = vmatpush1.bf16.msra.mxu0 %v419
    %485 = vmatprep.subr.bf16.mxu0 %v422
    %486 = vmatpush1.bf16.msra.mxu0 %v421
    %487 = vmatprep.subr.bf16.mxu0 %v424
    %488 = vmatpush1.bf16.msra.mxu0 %v423
    %489 = vmatprep.subr.bf16.mxu0 %v426
    %490 = vmatpush1.bf16.msra.mxu0 %v425
    %491 = vmatprep.subr.bf16.mxu0 %v428
    %492 = vmatpush1.bf16.msra.mxu0 %v427
    %493 = vmatprep.subr.bf16.mxu0 %v430
    %494 = vmatpush1.bf16.msra.mxu0 %v429
    %495 = vmatprep.subr.bf16.mxu0 %v432
    %496 = vmatpush1.bf16.msra.mxu0 %v431
    %497 = vmatprep.subr.bf16.mxu0 %v434
    %498 = vmatpush1.bf16.msra.mxu0 %v433
    %499 = vmatprep.subr.bf16.mxu0 %v436
    %500 = vmatpush1.bf16.msra.mxu0 %v435
    %501 = vmatprep.subr.bf16.mxu0 %v438
    %502 = vmatpush1.bf16.msra.mxu0 %v437
    %503 = vmatprep.subr.bf16.mxu0 %v440
    %504 = vmatpush1.bf16.msra.mxu0 %v439
    %505 = vmatprep.subr.bf16.mxu0 %v442
    %506 = vmatpush1.bf16.msra.mxu0 %v441
    %507 = vmatprep.mubr.bf16.mxu0 %v282
    %508 = vmatmul.mubr.bf16.gmra.mrb[0].mxu0 %v281
    %v509 = vpop.f32.mrb[0].mxu0
    %v510 = vadd.f32 0.0, %v509
    %v511 = vpop.f32.mrb[0].mxu0
    %v512 = vadd.f32 0.0, %v511
    %v513 = vpop.f32.mrb[0].mxu0
    %v514 = vpop.f32.mrb[0].mxu0
    %515 = vdwg.mxu0
    %s516 = scalar_lea.vmem [#allocation10], 2
    %v517 = vld [vmem:[%s516] ss:$8 sm:$0x3]
    %s518 = scalar_lea.vmem [#allocation10], 3
    %v519 = vld [vmem:[%s518] ss:$8 sm:$0x3]
    %v520 = vrot.slane %v510, 4
    %v521 = vadd.f32 %v510, %v520
    %v522 = vrot.slane %v521, 2
    %v523 = vadd.f32 %v521, %v522
    %v524 = vrot.slane %v523, 1
    %v525 = vadd.f32 %v523, %v524
    %v526 = vrot.slane %v512, 4
    %v527 = vadd.f32 %v512, %v526
    %v528 = vrot.slane %v527, 2
    %v529 = vadd.f32 %v527, %v528
    %v530 = vrot.slane %v529, 1
    %v531 = vadd.f32 %v529, %v530
    %v532 = vmul.f32 %v525, 0.125
    %v533 = vmul.f32 %v531, 0.125
    %v534 = vmul.f32 %v510, %v510
    %v535 = vmul.f32 %v512, %v512
    %v536 = vrot.slane %v534, 4
    %v537 = vadd.f32 %v534, %v536
    %v538 = vrot.slane %v537, 2
    %v539 = vadd.f32 %v537, %v538
    %v540 = vrot.slane %v539, 1
    %v541 = vadd.f32 %v539, %v540
    %v542 = vrot.slane %v535, 4
    %v543 = vadd.f32 %v535, %v542
    %v544 = vrot.slane %v543, 2
    %v545 = vadd.f32 %v543, %v544
    %v546 = vrot.slane %v545, 1
    %v547 = vadd.f32 %v545, %v546
    %v548 = vmul.f32 %v541, 0.125
    %v549 = vmul.f32 %v547, 0.125
    %v550 = vmul.f32 %v532, %v532
    %v551 = vmul.f32 %v533, %v533
    %v552 = vsub.f32 %v548, %v550
    %v553 = vsub.f32 %v549, %v551
    %v554 = vmax.f32 %v552, 0.0
    %v555 = vmax.f32 %v553, 0.0
    %v556 = vadd.f32 %v554, 1e-05
    %v557 = vadd.f32 %v555, 1e-05
    %v558 = vrsqrt.pop %v556
    %v559 = vrsqrt.pop %v557
    %v562 = vcombine.low %v558, %v559
    %v564 = vunpack.c.l.s4 1966171168
    %v565 = vunpack.c.0.s8 %v564
    %v566 = vlaneseq
    %v567 = vshrl.u32 %v566, 7
    %v568 = vsub.s32 %v565, %v567
    %v569 = vrot.slane %v562, %v568
    %v571 = vunpack.c.l.s4 1966171168
    %v572 = vunpack.c.0.s8 %v571
    %v573 = vlaneseq
    %v574 = vshrl.u32 %v573, 7
    %v575 = vsub.s32 %v572, %v574
    %v576 = vrot.slane %v569, %v575
    %v578 = vmul.f32 %v517, %v576
    %v580 = vlaneseq
    %v581 = vshrl.u32 %v580, 7
    %v582 = vsub.s32 0, %v581
    %v583 = vrot.slane %v578, %v582
    %v584 = vlaneseq
    %v585 = vshrl.u32 %v584, 7
    %v586 = vsub.s32 1, %v585
    %v587 = vrot.slane %v578, %v586
    %v590 = vmul.f32 %v532, %v583
    %v591 = vmul.f32 %v533, %v587
    %v594 = vcombine.low %v590, %v591
    %v596 = vunpack.c.l.s4 1966171168
    %v597 = vunpack.c.0.s8 %v596
    %v598 = vlaneseq
    %v599 = vshrl.u32 %v598, 7
    %v600 = vsub.s32 %v597, %v599
    %v601 = vrot.slane %v594, %v600
    %v603 = vunpack.c.l.s4 1966171168
    %v604 = vunpack.c.0.s8 %v603
    %v605 = vlaneseq
    %v606 = vshrl.u32 %v605, 7
    %v607 = vsub.s32 %v604, %v606
    %v608 = vrot.slane %v601, %v607
    %v610 = vsub.f32 %v519, %v608
    %v611 = vmul.f32 %v510, %v583
    %v612 = vmul.f32 %v512, %v587
    %v614 = vlaneseq
    %v615 = vshrl.u32 %v614, 7
    %v616 = vsub.s32 0, %v615
    %v617 = vrot.slane %v610, %v616
    %v618 = vlaneseq
    %v619 = vshrl.u32 %v618, 7
    %v620 = vsub.s32 1, %v619
    %v621 = vrot.slane %v610, %v620
    %v624 = vadd.f32 %v611, %v617
    %v625 = vadd.f32 %v612, %v621
    %v626 = vmax.f32 %v624, 0.0
    %v627 = vmax.f32 %v625, 0.0
    %v628 = vpack.c.bf16 %v626, %v626
    %v629 = vpack.c.bf16 %v627, %v627
    %v630 = vld [vmem:[#allocation8] sm:$0xf]
    %v631 = vld [vmem:[#allocation8 + $0x4] sm:$0xf]
    %v632 = vld [vmem:[#allocation8 + $0x8] sm:$0xf]
    %v633 = vld [vmem:[#allocation8 + $0xc] sm:$0xf]
    %v634 = vld [vmem:[#allocation8 + $0x10] sm:$0xf]
    %v635 = vld [vmem:[#allocation8 + $0x14] sm:$0xf]
    %v636 = vld [vmem:[#allocation8 + $0x18] sm:$0xf]
    %v637 = vld [vmem:[#allocation8 + $0x1c] sm:$0xf]
    %v638 = vld [vmem:[#allocation8 + $0x20] sm:$0xf]
    %v639 = vld [vmem:[#allocation8 + $0x24] sm:$0xf]
    %v640 = vld [vmem:[#allocation8 + $0x28] sm:$0xf]
    %v641 = vld [vmem:[#allocation8 + $0x2c] sm:$0xf]
    %v642 = vld [vmem:[#allocation8 + $0x30] sm:$0xf]
    %v643 = vld [vmem:[#allocation8 + $0x34] sm:$0xf]
    %v644 = vld [vmem:[#allocation8 + $0x38] sm:$0xf]
    %v645 = vld [vmem:[#allocation8 + $0x3c] sm:$0xf]
    %v646 = vld [vmem:[#allocation8 + $0x40] sm:$0xf]
    %v647 = vld [vmem:[#allocation8 + $0x44] sm:$0xf]
    %v648 = vld [vmem:[#allocation8 + $0x48] sm:$0xf]
    %v649 = vld [vmem:[#allocation8 + $0x4c] sm:$0xf]
    %v650 = vld [vmem:[#allocation8 + $0x50] sm:$0xf]
    %v651 = vld [vmem:[#allocation8 + $0x54] sm:$0xf]
    %v652 = vld [vmem:[#allocation8 + $0x58] sm:$0xf]
    %v653 = vld [vmem:[#allocation8 + $0x5c] sm:$0xf]
    %v654 = vld [vmem:[#allocation8 + $0x60] sm:$0xf]
    %v655 = vld [vmem:[#allocation8 + $0x64] sm:$0xf]
    %v656 = vld [vmem:[#allocation8 + $0x68] sm:$0xf]
    %v657 = vld [vmem:[#allocation8 + $0x6c] sm:$0xf]
    %v658 = vld [vmem:[#allocation8 + $0x70] sm:$0xf]
    %v659 = vld [vmem:[#allocation8 + $0x74] sm:$0xf]
    %v660 = vld [vmem:[#allocation8 + $0x78] sm:$0xf]
    %v661 = vld [vmem:[#allocation8 + $0x7c] sm:$0xf]
    %v662 = vld [vmem:[#allocation10 + $0x4] ss:$0 sm:$0xff]
    %v695 = vunpack.c.l.b16 %v630
    %v696 = vunpack.c.l.b16 %v631
    %v697 = vunpack.c.l.b16 %v632
    %v698 = vunpack.c.l.b16 %v633
    %v699 = vunpack.c.l.b16 %v634
    %v700 = vunpack.c.l.b16 %v635
    %v701 = vunpack.c.l.b16 %v636
    %v702 = vunpack.c.l.b16 %v637
    %v703 = vunpack.c.l.b16 %v638
    %v704 = vunpack.c.l.b16 %v639
    %v705 = vunpack.c.l.b16 %v640
    %v706 = vunpack.c.l.b16 %v641
    %v707 = vunpack.c.l.b16 %v642
    %v708 = vunpack.c.l.b16 %v643
    %v709 = vunpack.c.l.b16 %v644
    %v710 = vunpack.c.l.b16 %v645
    %v711 = vunpack.c.l.b16 %v646
    %v712 = vunpack.c.l.b16 %v647
    %v713 = vunpack.c.l.b16 %v648
    %v714 = vunpack.c.l.b16 %v649
    %v715 = vunpack.c.l.b16 %v650
    %v716 = vunpack.c.l.b16 %v651
    %v717 = vunpack.c.l.b16 %v652
    %v718 = vunpack.c.l.b16 %v653
    %v719 = vunpack.c.l.b16 %v654
    %v720 = vunpack.c.l.b16 %v655
    %v721 = vunpack.c.l.b16 %v656
    %v722 = vunpack.c.l.b16 %v657
    %v723 = vunpack.c.l.b16 %v658
    %v724 = vunpack.c.l.b16 %v659
    %v725 = vunpack.c.l.b16 %v660
    %v726 = vunpack.c.l.b16 %v661
    %v727 = vpack.c.b16 %v696, %v695
    %v728 = vpack.c.b16 %v698, %v697
    %v729 = vpack.c.b16 %v700, %v699
    %v730 = vpack.c.b16 %v702, %v701
    %v731 = vpack.c.b16 %v704, %v703
    %v732 = vpack.c.b16 %v706, %v705
    %v733 = vpack.c.b16 %v708, %v707
    %v734 = vpack.c.b16 %v710, %v709
    %v735 = vpack.c.b16 %v712, %v711
    %v736 = vpack.c.b16 %v714, %v713
    %v737 = vpack.c.b16 %v716, %v715
    %v738 = vpack.c.b16 %v718, %v717
    %v739 = vpack.c.b16 %v720, %v719
    %v740 = vpack.c.b16 %v722, %v721
    %v741 = vpack.c.b16 %v724, %v723
    %v742 = vpack.c.b16 %v726, %v725
    %759 = vmatprep.subr.bf16.mxu0 0
    %760 = vmatpush1.bf16.msra.mxu0 %v727
    %761 = vmatprep.subr.bf16.mxu0 0
    %762 = vmatpush1.bf16.msra.mxu0 %v728
    %763 = vmatprep.subr.bf16.mxu0 0
    %764 = vmatpush1.bf16.msra.mxu0 %v729
    %765 = vmatprep.subr.bf16.mxu0 0
    %766 = vmatpush1.bf16.msra.mxu0 %v730
    %767 = vmatprep.subr.bf16.mxu0 0
    %768 = vmatpush1.bf16.msra.mxu0 %v731
    %769 = vmatprep.subr.bf16.mxu0 0
    %770 = vmatpush1.bf16.msra.mxu0 %v732
    %771 = vmatprep.subr.bf16.mxu0 0
    %772 = vmatpush1.bf16.msra.mxu0 %v733
    %773 = vmatprep.subr.bf16.mxu0 0
    %774 = vmatpush1.bf16.msra.mxu0 %v734
    %775 = vmatprep.subr.bf16.mxu0 0
    %776 = vmatpush1.bf16.msra.mxu0 %v735
    %777 = vmatprep.subr.bf16.mxu0 0
    %778 = vmatpush1.bf16.msra.mxu0 %v736
    %779 = vmatprep.subr.bf16.mxu0 0
    %780 = vmatpush1.bf16.msra.mxu0 %v737
    %781 = vmatprep.subr.bf16.mxu0 0
    %782 = vmatpush1.bf16.msra.mxu0 %v738
    %783 = vmatprep.subr.bf16.mxu0 0
    %784 = vmatpush1.bf16.msra.mxu0 %v739
    %785 = vmatprep.subr.bf16.mxu0 0
    %786 = vmatpush1.bf16.msra.mxu0 %v740
    %787 = vmatprep.subr.bf16.mxu0 0
    %788 = vmatpush1.bf16.msra.mxu0 %v741
    %789 = vmatprep.subr.bf16.mxu0 0
    %790 = vmatpush1.bf16.msra.mxu0 %v742
    %791 = vmatprep.mubr.bf16.mxu0 %v629
    %792 = vmatmul.mubr.bf16.gmra.mrb[0].mxu0 %v628
    %v793 = vpop.f32.mrb[0].mxu0
    %v794 = vadd.f32 %v662, %v793
    %v795 = vpop.f32.mrb[0].mxu0
    %v796 = vpop.f32.mrb[0].mxu0
    %v797 = vpop.f32.mrb[0].mxu0
    %798 = vdwg.mxu0
    %799 = vst [vmem:[#allocation11] sm:$0xff] %v794
    // Predicated region
    $region42: #{refinement_mlp.1} parent=1 // pred_check
      _
    $region43: #{refinement_mlp.1} parent=1 // pred_check_branch
      %801 = sbr.rel (0) target = $region45
    $region44: #{refinement_mlp.1} parent=1 // pred_region
      %s803 = ssub.s32 128, 128
      %804 = vsyncadd [#allocation4], %s803
      %s806 = sshll.u32 [#allocation11], 4
      %s807 = int_to_ptr.vmem [resolvable:$true] %s806
      %809 = dma.vmem_to_hbm [thread:$0]  %s807, 128, %s5, [#allocation4]
    $region45: #{refinement_mlp.1} parent=1 // pred_fallthru
      _
    // Predicated region
    $region46: #{refinement_mlp.1} parent=1 // pred_check
      _
    $region47: #{refinement_mlp.1} parent=1 // pred_check_branch
      %811 = sbr.rel (0) target = $region49
    $region48: #{refinement_mlp.1} parent=1 // pred_region
      %812 = dma.done [#allocation4], 128
    $region49: #{refinement_mlp.1} parent=1 // pred_fallthru
      _
    %813 = vsyncpa [#allocation3], 1
    %814 = vsyncpa [#allocation6], 1
    %815 = vsyncpa [#allocation9], 1
    %816 = vsyncpa [#allocation4], 1

</llo_original>
